<compile_context>
chip_gen: v7x
topology: tpu7x:2x2x1
jax: 0.10.0
libtpu: 0.0.40
codegen_flags: <defaults>
</compile_context>

<pallas_src>
import jax
import jax.numpy as jnp
from jax.experimental import pallas as pl
from jax.experimental.pallas import tpu as pltpu


def _fertility_kernel(x_ref, w_ref, b_ref, out_ref):
    # x_ref: [TM, E] bf16, w_ref: [E, L] bf16, b_ref: [1, L] f32,
    # out_ref: [1, TM] int32 (lane-dense row of fertility class indices).
    logits = jnp.dot(x_ref[...], w_ref[...],
                     preferred_element_type=jnp.float32) + b_ref[...]   # [TM, L] f32

    # ReLU (kept: it matters for tie behavior when all logits are negative).
    h = jnp.maximum(logits, 0.0)

    # First-occurrence argmax over the class axis (softmax is redundant here).
    L = h.shape[-1]
    maxv = jnp.max(h, axis=-1, keepdims=True)                          # [TM, 1]
    idx = jax.lax.broadcasted_iota(jnp.int32, h.shape, dimension=1)    # [TM, L]
    cand = jnp.where(h == maxv, idx, jnp.int32(L))
    arg = jnp.min(cand, axis=-1)                                       # [TM] int32

    # Lane-dense store: one [1, TM] row per grid step (relayout goes to XLU).
    out_ref[...] = arg.astype(jnp.int32).reshape(1, arg.shape[0])


def fertility_predictor(encoder_output, weight, bias, *, tm=512):
    """encoder_output: [S, N, E]; weight: [L, E] (torch Linear layout);
    bias: [L].  Returns fertility class indices [S, N] int32."""
    S, N, E = encoder_output.shape
    L = weight.shape[0]
    M = S * N

    # Lane-aligned row tile (multiple of 128), no larger than the padded M.
    tm_eff = min(tm, pl.cdiv(M, 128) * 128)
    M_pad = pl.cdiv(M, tm_eff) * tm_eff
    num_tiles = M_pad // tm_eff

    # bf16 activations/weights halve HBM traffic; MXU accumulates in f32.
    x = encoder_output.reshape(M, E).astype(jnp.bfloat16)
    if M_pad != M:
        x = jnp.pad(x, ((0, M_pad - M), (0, 0)))   # padded rows sliced off below
    w = jnp.transpose(weight).astype(jnp.bfloat16)  # [E, L]
    b = bias.reshape(1, L).astype(jnp.float32)

    out = pl.pallas_call(
        _fertility_kernel,
        out_shape=jax.ShapeDtypeStruct((1, M_pad), jnp.int32),
        grid=(num_tiles,),
        in_specs=[
            pl.BlockSpec((tm_eff, E), lambda i: (i, 0)),   # row tile of activations
            pl.BlockSpec((E, L), lambda i: (0, 0)),        # whole weight, resident
            pl.BlockSpec((1, L), lambda i: (0, 0)),        # bias, resident
        ],
        out_specs=pl.BlockSpec((1, tm_eff), lambda i: (0, i)),  # lane-dense row tile
        compiler_params=pltpu.CompilerParams(
            dimension_semantics=("parallel",)),
    )(x, w, b)

    return out.reshape(M_pad)[:M].reshape(S, N)


if __name__ == "__main__":
    # Small shapes consistent with the module: S=8 (seq), N=2 (batch),
    # d_embed=32, L=8 fertility classes.
    S, N, E, L = 8, 2, 32, 8

    key = jax.random.PRNGKey(0)
    k_x, k_w, k_b = jax.random.split(key, 3)

    encoder_output = jax.random.normal(k_x, (S, N, E), dtype=jnp.float32)
    # Deterministic Linear params (torch-style uniform(-1/sqrt(E), 1/sqrt(E)))
    bound = 1.0 / (E ** 0.5)
    weight = jax.random.uniform(k_w, (L, E), minval=-bound, maxval=bound,
                                dtype=jnp.float32)
    bias = jax.random.uniform(k_b, (L,), minval=-bound, maxval=bound,
                              dtype=jnp.float32)

    ferts = jax.jit(fertility_predictor)(encoder_output, weight, bias)
    ferts = jax.block_until_ready(ferts)

    # Pure-JAX reference (same bf16 matmul path; softmax dropped — it is
    # monotonic so the argmax is unchanged).
    x_bf = encoder_output.reshape(-1, E).astype(jnp.bfloat16)
    w_bf = jnp.transpose(weight).astype(jnp.bfloat16)
    ref_logits = jnp.dot(x_bf, w_bf, preferred_element_type=jnp.float32) + bias
    ref = jnp.argmax(jax.nn.relu(ref_logits), axis=-1).reshape(S, N)

    assert ferts.shape == (S, N)
    assert jnp.array_equal(ferts.astype(jnp.int32), ref.astype(jnp.int32))

    print("KERNEL_OK")
</pallas_src>

<mosaic_0001>
module attributes {stable_mosaic.version = 11 : i64} {
  func.func @_fertility_kernel(%arg0: i32, %arg1: memref<128x32xbf16, #tpu.memory_space<vmem>>, %arg2: memref<32x8xbf16, #tpu.memory_space<vmem>>, %arg3: memref<1x8xf32, #tpu.memory_space<vmem>>, %arg4: memref<1x128xi32, #tpu.memory_space<vmem>>) attributes {dimension_semantics = [#tpu.dimension_semantics<parallel>], iteration_bounds = array<i64: 1>, scalar_prefetch = 0 : i64, scratch_operands = 0 : i64, tpu.core_type = #tpu.core_type<tc>, window_params = [{transform_indices = @transform_0, window_bounds = array<i64: 128, 32>}, {pipeline_mode = #tpu.pipeline_mode<synchronous>, transform_indices = @transform_1, window_bounds = array<i64: 32, 8>}, {pipeline_mode = #tpu.pipeline_mode<synchronous>, transform_indices = @transform_2, window_bounds = array<i64: 1, 8>}, {transform_indices = @transform_3, window_bounds = array<i64: 1, 128>}]} {
    %c0 = arith.constant 0 : index
    %c0_0 = arith.constant 0 : index
    %0 = vector.load %arg1[%c0, %c0_0] : memref<128x32xbf16, #tpu.memory_space<vmem>>, vector<128x32xbf16>
    %c0_1 = arith.constant 0 : index
    %c0_2 = arith.constant 0 : index
    %1 = vector.load %arg2[%c0_1, %c0_2] : memref<32x8xbf16, #tpu.memory_space<vmem>>, vector<32x8xbf16>
    %cst = arith.constant dense<0.000000e+00> : vector<128x8xf32>
    %2 = tpu.matmul %0, %1, %cst {dimension_numbers = #tpu.dot_dimension_numbers<[1], [0], [0], [1], [0, 0, 1, 1], [], []>} : vector<128x32xbf16>, vector<32x8xbf16>, vector<128x8xf32> -> vector<128x8xf32>
    %c0_3 = arith.constant 0 : index
    %c0_4 = arith.constant 0 : index
    %3 = vector.load %arg3[%c0_3, %c0_4] : memref<1x8xf32, #tpu.memory_space<vmem>>, vector<1x8xf32>
    %4 = vector.broadcast %3 : vector<1x8xf32> to vector<128x8xf32>
    %5 = arith.addf %2, %4 : vector<128x8xf32>
    %cst_5 = arith.constant 0.000000e+00 : f32
    %6 = vector.broadcast %cst_5 : f32 to vector<128x8xf32>
    %7 = arith.maximumf %5, %6 : vector<128x8xf32>
    %cst_6 = arith.constant dense<0xFF800000> : vector<128xf32>
    %8 = vector.multi_reduction <maximumf>, %7, %cst_6 [1] : vector<128x8xf32> to vector<128xf32>
    %9 = vector.shape_cast %8 : vector<128xf32> to vector<128x1xf32>
    %10 = tpu.iota {dimensions = array<i32: 1>} : vector<128x8xi32>
    %11 = vector.broadcast %9 : vector<128x1xf32> to vector<128x8xf32>
    %12 = arith.cmpf oeq, %7, %11 : vector<128x8xf32>
    %c8_i32 = arith.constant 8 : i32
    %13 = vector.broadcast %c8_i32 : i32 to vector<128x8xi32>
    %14 = arith.select %12, %10, %13 : vector<128x8xi1>, vector<128x8xi32>
    %cst_7 = arith.constant dense<2147483647> : vector<128xi32>
    %15 = vector.multi_reduction <minsi>, %14, %cst_7 [1] : vector<128x8xi32> to vector<128xi32>
    %16 = vector.shape_cast %15 : vector<128xi32> to vector<1x128xi32>
    %c0_8 = arith.constant 0 : index
    %c0_9 = arith.constant 0 : index
    %17 = vector.load %arg4[%c0_8, %c0_9] : memref<1x128xi32, #tpu.memory_space<vmem>>, vector<1x128xi32>
    tpu.vector_store %arg4[%c0_8, %c0_9], %16 {strides = array<i32>} : memref<1x128xi32, #tpu.memory_space<vmem>>, vector<1x128xi32>,
    return
  }
  func.func @transform_0(%arg0: i32) -> (i32, i32) {
    %c0_i32 = arith.constant 0 : i32
    %c0_i32_0 = arith.constant 0 : i32
    return %arg0, %c0_i32 : i32, i32
  }
  func.func @transform_1(%arg0: i32) -> (i32, i32) {
    %c0_i32 = arith.constant 0 : i32
    %c0_i32_0 = arith.constant 0 : i32
    %c0_i32_1 = arith.constant 0 : i32
    return %c0_i32, %c0_i32_0 : i32, i32
  }
  func.func @transform_2(%arg0: i32) -> (i32, i32) {
    %c0_i32 = arith.constant 0 : i32
    %c0_i32_0 = arith.constant 0 : i32
    %c0_i32_1 = arith.constant 0 : i32
    return %c0_i32, %c0_i32_0 : i32, i32
  }
  func.func @transform_3(%arg0: i32) -> (i32, i32) {
    %c0_i32 = arith.constant 0 : i32
    %c0_i32_0 = arith.constant 0 : i32
    return %c0_i32, %arg0 : i32, i32
  }
}

</mosaic_0001>

<llo_original>
// kernel: fertility_predictor.1
$region0: #{fertility_predictor.1}
  #allocation0 [shape = 'u32[]', space=smem, size = 0x4, offset = 0x4, fixed_abs, tag = 'smem constant byte address 0x4 - core index']
  #allocation1 [shape = 'u32[144,128]{1,0:T(1,128)}', space=vmem, size = 0x12000, scoped, tag = 'internal scratch']
  %s0 = inlined_call_operand.vmem [shape: bf16[128,32], index: 0, kind: input, shape index: {}]
  %s1 = inlined_call_operand.vmem [shape: bf16[32,8], index: 1, kind: input, shape index: {}]
  %s2 = inlined_call_operand.vmem [shape: f32[1,8], index: 2, kind: input, shape index: {}]
  %s3 = inlined_call_operand.vmem [shape: s32[1,128], index: 3, kind: output, shape index: {}]
  %s4 = sld [smem:[#allocation0]]
  $region22: #{fertility_predictor.1} parent=0
    _
  %s6 = ssub.s32 1, %s4
  %s7 = scalar_select 0, %s6, %s4
  // Predicated region
  $region2: #{fertility_predictor.1} parent=0 // pred_check
    _
  $region3: #{fertility_predictor.1} parent=0 // pred_check_branch
    %9 = sbr.rel (0) target = $region5
  $region4: #{fertility_predictor.1} parent=0 // pred_region
    _
  $region5: #{fertility_predictor.1} parent=0 // pred_fallthru
    _
  // Predicated region
  $region6: #{fertility_predictor.1} parent=0 // pred_check
    _
  $region7: #{fertility_predictor.1} parent=0 // pred_check_branch
    %11 = sbr.rel (0) target = $region9
  $region8: #{fertility_predictor.1} parent=0 // pred_region
    _
  $region9: #{fertility_predictor.1} parent=0 // pred_fallthru
    _
  // Predicated region
  $region10: #{fertility_predictor.1} parent=0 // pred_check
    _
  $region11: #{fertility_predictor.1} parent=0 // pred_check_branch
    %13 = sbr.rel (0) target = $region13
  $region12: #{fertility_predictor.1} parent=0 // pred_region
    _
  $region13: #{fertility_predictor.1} parent=0 // pred_fallthru
    _
  %v15 = vld [vmem:[%s0] sm:$0xf]
  %v16 = vld [vmem:[%s0 + $0x4] sm:$0xf]
  %v17 = vld [vmem:[%s0 + $0x8] sm:$0xf]
  %v18 = vld [vmem:[%s0 + $0xc] sm:$0xf]
  %v19 = vld [vmem:[%s0 + $0x10] sm:$0xf]
  %v20 = vld [vmem:[%s0 + $0x14] sm:$0xf]
  %v21 = vld [vmem:[%s0 + $0x18] sm:$0xf]
  %v22 = vld [vmem:[%s0 + $0x1c] sm:$0xf]
  %v23 = vld [vmem:[%s0 + $0x20] sm:$0xf]
  %v24 = vld [vmem:[%s0 + $0x24] sm:$0xf]
  %v25 = vld [vmem:[%s0 + $0x28] sm:$0xf]
  %v26 = vld [vmem:[%s0 + $0x2c] sm:$0xf]
  %v27 = vld [vmem:[%s0 + $0x30] sm:$0xf]
  %v28 = vld [vmem:[%s0 + $0x34] sm:$0xf]
  %v29 = vld [vmem:[%s0 + $0x38] sm:$0xf]
  %v30 = vld [vmem:[%s0 + $0x3c] sm:$0xf]
  %v31 = vld [vmem:[%s1] sm:$0xf]
  %v32 = vld [vmem:[%s1 + $0x4] sm:$0xf]
  %v33 = vld [vmem:[%s1 + $0x8] sm:$0xf]
  %v34 = vld [vmem:[%s1 + $0xc] sm:$0xf]
  %v35 = vld [vmem:[%s2] sm:$0x1]
  %v37 = vlaneseq
  %v38 = vshrl.u32 %v37, 7
  %v39 = vsub.s32 0, %v38
  %v40 = vrot.slane %v35, %v39
  %v58 = vunpack.c.l.b16 %v15
  %v59 = vunpack.c.l.b16 %v16
  %v60 = vunpack.c.l.b16 %v17
  %v61 = vunpack.c.l.b16 %v18
  %v62 = vunpack.c.l.b16 %v19
  %v63 = vunpack.c.l.b16 %v20
  %v64 = vunpack.c.l.b16 %v21
  %v65 = vunpack.c.l.b16 %v22
  %v66 = vunpack.c.l.b16 %v23
  %v67 = vunpack.c.l.b16 %v24
  %v68 = vunpack.c.l.b16 %v25
  %v69 = vunpack.c.l.b16 %v26
  %v70 = vunpack.c.l.b16 %v27
  %v71 = vunpack.c.l.b16 %v28
  %v72 = vunpack.c.l.b16 %v29
  %v73 = vunpack.c.l.b16 %v30
  %v74 = vpack.c.b16 %v59, %v58
  %v75 = vpack.c.b16 %v61, %v60
  %v76 = vpack.c.b16 %v63, %v62
  %v77 = vpack.c.b16 %v65, %v64
  %v78 = vpack.c.b16 %v67, %v66
  %v79 = vpack.c.b16 %v69, %v68
  %v80 = vpack.c.b16 %v71, %v70
  %v81 = vpack.c.b16 %v73, %v72
  %v86 = vunpack.c.l.b16 %v31
  %v87 = vunpack.c.l.b16 %v32
  %v88 = vunpack.c.l.b16 %v33
  %v89 = vunpack.c.l.b16 %v34
  %v90 = vpack.c.b16 %v87, %v86
  %v91 = vpack.c.b16 %v89, %v88
  %vm94 = vcmask 261120
  %v96 = vsel %vm94, %v74, 0
  %v99 = vsel %vm94, %v75, 0
  %v102 = vsel %vm94, %v76, 0
  %v105 = vsel %vm94, %v77, 0
  %v108 = vsel %vm94, %v78, 0
  %v111 = vsel %vm94, %v79, 0
  %v114 = vsel %vm94, %v80, 0
  %v117 = vsel %vm94, %v81, 0
  %119 = vmatprep.subr.bf16.mxu0 0
  %120 = vmatpush1.bf16.msra.mxu0 %v90
  %121 = vmatprep.subr.bf16.mxu0 0
  %122 = vmatpush1.bf16.msra.mxu0 %v91
  %123 = vmatprep.subr.bf16.mxu0 0
  %124 = vmatpush1.bf16.msra.mxu0 0
  %125 = vmatprep.subr.bf16.mxu0 0
  %126 = vmatpush1.bf16.msra.mxu0 0
  %127 = vmatprep.subr.bf16.mxu0 0
  %128 = vmatpush1.bf16.msra.mxu0 0
  %129 = vmatprep.subr.bf16.mxu0 0
  %130 = vmatpush1.bf16.msra.mxu0 0
  %131 = vmatprep.subr.bf16.mxu0 0
  %132 = vmatpush1.bf16.msra.mxu0 0
  %133 = vmatprep.subr.bf16.mxu0 0
  %134 = vmatpush1.bf16.msra.mxu0 0
  %135 = vmatprep.subr.bf16.mxu0 0
  %136 = vmatpush1.bf16.msra.mxu0 0
  %137 = vmatprep.subr.bf16.mxu0 0
  %138 = vmatpush1.bf16.msra.mxu0 0
  %139 = vmatprep.subr.bf16.mxu0 0
  %140 = vmatpush1.bf16.msra.mxu0 0
  %141 = vmatprep.subr.bf16.mxu0 0
  %142 = vmatpush1.bf16.msra.mxu0 0
  %143 = vmatprep.subr.bf16.mxu0 0
  %144 = vmatpush1.bf16.msra.mxu0 0
  %145 = vmatprep.subr.bf16.mxu0 0
  %146 = vmatpush1.bf16.msra.mxu0 0
  %147 = vmatprep.subr.bf16.mxu0 0
  %148 = vmatpush1.bf16.msra.mxu0 0
  %149 = vmatprep.subr.bf16.mxu0 0
  %150 = vmatpush1.bf16.msra.mxu0 0
  %151 = vmatprep.mubr.bf16.mxu0 0
  %152 = vmatmul.mubr.bf16.gmra.mrb[0].mxu0 %v96
  %v153 = vpop.f32.mrb[0].mxu0
  %v154 = vadd.f32 %v40, %v153
  %v155 = vpop.f32.mrb[0].mxu0
  %v156 = vpop.f32.mrb[0].mxu0
  %v157 = vadd.f32 %v40, %v156
  %v158 = vpop.f32.mrb[0].mxu0
  %159 = vmatprep.mubr.bf16.mxu0 0
  %160 = vmatmul.mubr.bf16.gmra.mrb[0].mxu0 %v99
  %v161 = vpop.f32.mrb[0].mxu0
  %v162 = vadd.f32 %v40, %v161
  %v163 = vpop.f32.mrb[0].mxu0
  %v164 = vpop.f32.mrb[0].mxu0
  %v165 = vadd.f32 %v40, %v164
  %v166 = vpop.f32.mrb[0].mxu0
  %167 = vmatprep.mubr.bf16.mxu0 0
  %168 = vmatmul.mubr.bf16.gmra.mrb[0].mxu0 %v102
  %v169 = vpop.f32.mrb[0].mxu0
  %v170 = vadd.f32 %v40, %v169
  %v171 = vpop.f32.mrb[0].mxu0
  %v172 = vpop.f32.mrb[0].mxu0
  %v173 = vadd.f32 %v40, %v172
  %v174 = vpop.f32.mrb[0].mxu0
  %175 = vmatprep.mubr.bf16.mxu0 0
  %176 = vmatmul.mubr.bf16.gmra.mrb[0].mxu0 %v105
  %v177 = vpop.f32.mrb[0].mxu0
  %v178 = vadd.f32 %v40, %v177
  %v179 = vpop.f32.mrb[0].mxu0
  %v180 = vpop.f32.mrb[0].mxu0
  %v181 = vadd.f32 %v40, %v180
  %v182 = vpop.f32.mrb[0].mxu0
  %183 = vmatprep.mubr.bf16.mxu0 0
  %184 = vmatmul.mubr.bf16.gmra.mrb[0].mxu0 %v108
  %v185 = vpop.f32.mrb[0].mxu0
  %v186 = vadd.f32 %v40, %v185
  %v187 = vpop.f32.mrb[0].mxu0
  %v188 = vpop.f32.mrb[0].mxu0
  %v189 = vadd.f32 %v40, %v188
  %v190 = vpop.f32.mrb[0].mxu0
  %191 = vmatprep.mubr.bf16.mxu0 0
  %192 = vmatmul.mubr.bf16.gmra.mrb[0].mxu0 %v111
  %v193 = vpop.f32.mrb[0].mxu0
  %v194 = vadd.f32 %v40, %v193
  %v195 = vpop.f32.mrb[0].mxu0
  %v196 = vpop.f32.mrb[0].mxu0
  %v197 = vadd.f32 %v40, %v196
  %v198 = vpop.f32.mrb[0].mxu0
  %199 = vmatprep.mubr.bf16.mxu0 0
  %200 = vmatmul.mubr.bf16.gmra.mrb[0].mxu0 %v114
  %v201 = vpop.f32.mrb[0].mxu0
  %v202 = vadd.f32 %v40, %v201
  %v203 = vpop.f32.mrb[0].mxu0
  %v204 = vpop.f32.mrb[0].mxu0
  %v205 = vadd.f32 %v40, %v204
  %v206 = vpop.f32.mrb[0].mxu0
  %207 = vmatprep.mubr.bf16.mxu0 0
  %208 = vmatmul.mubr.bf16.gmra.mrb[0].mxu0 %v117
  %v209 = vpop.f32.mrb[0].mxu0
  %v210 = vadd.f32 %v40, %v209
  %v211 = vpop.f32.mrb[0].mxu0
  %v212 = vpop.f32.mrb[0].mxu0
  %v213 = vadd.f32 %v40, %v212
  %v214 = vpop.f32.mrb[0].mxu0
  %215 = vdwg.mxu0
  %v216 = vmax.f32 %v154, 0.0
  %v217 = vmax.f32 %v157, 0.0
  %v218 = vmax.f32 %v162, 0.0
  %v219 = vmax.f32 %v165, 0.0
  %v220 = vmax.f32 %v170, 0.0
  %v221 = vmax.f32 %v173, 0.0
  %v222 = vmax.f32 %v178, 0.0
  %v223 = vmax.f32 %v181, 0.0
  %v224 = vmax.f32 %v186, 0.0
  %v225 = vmax.f32 %v189, 0.0
  %v226 = vmax.f32 %v194, 0.0
  %v227 = vmax.f32 %v197, 0.0
  %v228 = vmax.f32 %v202, 0.0
  %v229 = vmax.f32 %v205, 0.0
  %v230 = vmax.f32 %v210, 0.0
  %v231 = vmax.f32 %v213, 0.0
  %vm232 = vcmask 64512
  %v233 = vsel %vm232, %v216, -inf
  %234 = vmax.xlane.f32.xlu0 %v233
  %v235 = vpop.xlane.xlu0 %234
  %v236 = vsel %vm232, %v217, -inf
  %237 = vmax.xlane.f32.xlu0 %v236
  %v238 = vpop.xlane.xlu0 %237
  %v239 = vsel %vm232, %v218, -inf
  %240 = vmax.xlane.f32.xlu0 %v239
  %v241 = vpop.xlane.xlu0 %240
  %v242 = vsel %vm232, %v219, -inf
  %243 = vmax.xlane.f32.xlu0 %v242
  %v244 = vpop.xlane.xlu0 %243
  %v245 = vsel %vm232, %v220, -inf
  %246 = vmax.xlane.f32.xlu0 %v245
  %v247 = vpop.xlane.xlu0 %246
  %v248 = vsel %vm232, %v221, -inf
  %249 = vmax.xlane.f32.xlu0 %v248
  %v250 = vpop.xlane.xlu0 %249
  %v251 = vsel %vm232, %v222, -inf
  %252 = vmax.xlane.f32.xlu0 %v251
  %v253 = vpop.xlane.xlu0 %252
  %v254 = vsel %vm232, %v223, -inf
  %255 = vmax.xlane.f32.xlu0 %v254
  %v256 = vpop.xlane.xlu0 %255
  %v257 = vsel %vm232, %v224, -inf
  %258 = vmax.xlane.f32.xlu0 %v257
  %v259 = vpop.xlane.xlu0 %258
  %v260 = vsel %vm232, %v225, -inf
  %261 = vmax.xlane.f32.xlu0 %v260
  %v262 = vpop.xlane.xlu0 %261
  %v263 = vsel %vm232, %v226, -inf
  %264 = vmax.xlane.f32.xlu0 %v263
  %v265 = vpop.xlane.xlu0 %264
  %v266 = vsel %vm232, %v227, -inf
  %267 = vmax.xlane.f32.xlu0 %v266
  %v268 = vpop.xlane.xlu0 %267
  %v269 = vsel %vm232, %v228, -inf
  %270 = vmax.xlane.f32.xlu0 %v269
  %v271 = vpop.xlane.xlu0 %270
  %v272 = vsel %vm232, %v229, -inf
  %273 = vmax.xlane.f32.xlu0 %v272
  %v274 = vpop.xlane.xlu0 %273
  %v275 = vsel %vm232, %v230, -inf
  %276 = vmax.xlane.f32.xlu0 %v275
  %v277 = vpop.xlane.xlu0 %276
  %v278 = vsel %vm232, %v231, -inf
  %279 = vmax.xlane.f32.xlu0 %v278
  %v280 = vpop.xlane.xlu0 %279
  %v281 = vlaneseq
  %v282 = vand.u32 %v281, 127
  %vm283 = vcmp.eq.f32.partialorder %v216, %v235
  %vm284 = vcmp.eq.f32.partialorder %v217, %v238
  %vm285 = vcmp.eq.f32.partialorder %v218, %v241
  %vm286 = vcmp.eq.f32.partialorder %v219, %v244
  %vm287 = vcmp.eq.f32.partialorder %v220, %v247
  %vm288 = vcmp.eq.f32.partialorder %v221, %v250
  %vm289 = vcmp.eq.f32.partialorder %v222, %v253
  %vm290 = vcmp.eq.f32.partialorder %v223, %v256
  %vm291 = vcmp.eq.f32.partialorder %v224, %v259
  %vm292 = vcmp.eq.f32.partialorder %v225, %v262
  %vm293 = vcmp.eq.f32.partialorder %v226, %v265
  %vm294 = vcmp.eq.f32.partialorder %v227, %v268
  %vm295 = vcmp.eq.f32.partialorder %v228, %v271
  %vm296 = vcmp.eq.f32.partialorder %v229, %v274
  %vm297 = vcmp.eq.f32.partialorder %v230, %v277
  %vm298 = vcmp.eq.f32.partialorder %v231, %v280
  %v299 = vsel %vm283, %v282, 8
  %v300 = vsel %vm284, %v282, 8
  %v301 = vsel %vm285, %v282, 8
  %v302 = vsel %vm286, %v282, 8
  %v303 = vsel %vm287, %v282, 8
  %v304 = vsel %vm288, %v282, 8
  %v305 = vsel %vm289, %v282, 8
  %v306 = vsel %vm290, %v282, 8
  %v307 = vsel %vm291, %v282, 8
  %v308 = vsel %vm292, %v282, 8
  %v309 = vsel %vm293, %v282, 8
  %v310 = vsel %vm294, %v282, 8
  %v311 = vsel %vm295, %v282, 8
  %v312 = vsel %vm296, %v282, 8
  %v313 = vsel %vm297, %v282, 8
  %v314 = vsel %vm298, %v282, 8
  %v315 = vsel %vm232, %v299, 2147483647
  %v316 = vand.u32 %v315, 65535
  %v317 = vshra.s32 %v315, 16
  %v318 = vcvt.s32.f32 %v316
  %v319 = vcvt.s32.f32 %v317
  %320 = vmin.xlane.f32.xlu0 %v319
  %v321 = vpop.xlane.xlu0 %320
  %vm322 = vcmp.eq.f32.partialorder %v319, %v321
  %v323 = vsel %vm322, %v318, inf
  %324 = vmin.xlane.f32.xlu0 %v323
  %v325 = vpop.xlane.xlu0 %324
  %v326 = vcvt.f32.s32 %v325
  %v327 = vcvt.f32.s32 %v321
  %v328 = vshll.u32 %v327, 16
  %v329 = vadd.s32 %v328, %v326
  %v330 = vsel %vm232, %v300, 2147483647
  %v331 = vand.u32 %v330, 65535
  %v332 = vshra.s32 %v330, 16
  %v333 = vcvt.s32.f32 %v331
  %v334 = vcvt.s32.f32 %v332
  %335 = vmin.xlane.f32.xlu0 %v334
  %v336 = vpop.xlane.xlu0 %335
  %vm337 = vcmp.eq.f32.partialorder %v334, %v336
  %v338 = vsel %vm337, %v333, inf
  %339 = vmin.xlane.f32.xlu0 %v338
  %v340 = vpop.xlane.xlu0 %339
  %v341 = vcvt.f32.s32 %v340
  %v342 = vcvt.f32.s32 %v336
  %v343 = vshll.u32 %v342, 16
  %v344 = vadd.s32 %v343, %v341
  %v345 = vsel %vm232, %v301, 2147483647
  %v346 = vand.u32 %v345, 65535
  %v347 = vshra.s32 %v345, 16
  %v348 = vcvt.s32.f32 %v346
  %v349 = vcvt.s32.f32 %v347
  %350 = vmin.xlane.f32.xlu0 %v349
  %v351 = vpop.xlane.xlu0 %350
  %vm352 = vcmp.eq.f32.partialorder %v349, %v351
  %v353 = vsel %vm352, %v348, inf
  %354 = vmin.xlane.f32.xlu0 %v353
  %v355 = vpop.xlane.xlu0 %354
  %v356 = vcvt.f32.s32 %v355
  %v357 = vcvt.f32.s32 %v351
  %v358 = vshll.u32 %v357, 16
  %v359 = vadd.s32 %v358, %v356
  %v360 = vsel %vm232, %v302, 2147483647
  %v361 = vand.u32 %v360, 65535
  %v362 = vshra.s32 %v360, 16
  %v363 = vcvt.s32.f32 %v361
  %v364 = vcvt.s32.f32 %v362
  %365 = vmin.xlane.f32.xlu0 %v364
  %v366 = vpop.xlane.xlu0 %365
  %vm367 = vcmp.eq.f32.partialorder %v364, %v366
  %v368 = vsel %vm367, %v363, inf
  %369 = vmin.xlane.f32.xlu0 %v368
  %v370 = vpop.xlane.xlu0 %369
  %v371 = vcvt.f32.s32 %v370
  %v372 = vcvt.f32.s32 %v366
  %v373 = vshll.u32 %v372, 16
  %v374 = vadd.s32 %v373, %v371
  %v375 = vsel %vm232, %v303, 2147483647
  %v376 = vand.u32 %v375, 65535
  %v377 = vshra.s32 %v375, 16
  %v378 = vcvt.s32.f32 %v376
  %v379 = vcvt.s32.f32 %v377
  %380 = vmin.xlane.f32.xlu0 %v379
  %v381 = vpop.xlane.xlu0 %380
  %vm382 = vcmp.eq.f32.partialorder %v379, %v381
  %v383 = vsel %vm382, %v378, inf
  %384 = vmin.xlane.f32.xlu0 %v383
  %v385 = vpop.xlane.xlu0 %384
  %v386 = vcvt.f32.s32 %v385
  %v387 = vcvt.f32.s32 %v381
  %v388 = vshll.u32 %v387, 16
  %v389 = vadd.s32 %v388, %v386
  %v390 = vsel %vm232, %v304, 2147483647
  %v391 = vand.u32 %v390, 65535
  %v392 = vshra.s32 %v390, 16
  %v393 = vcvt.s32.f32 %v391
  %v394 = vcvt.s32.f32 %v392
  %395 = vmin.xlane.f32.xlu0 %v394
  %v396 = vpop.xlane.xlu0 %395
  %vm397 = vcmp.eq.f32.partialorder %v394, %v396
  %v398 = vsel %vm397, %v393, inf
  %399 = vmin.xlane.f32.xlu0 %v398
  %v400 = vpop.xlane.xlu0 %399
  %v401 = vcvt.f32.s32 %v400
  %v402 = vcvt.f32.s32 %v396
  %v403 = vshll.u32 %v402, 16
  %v404 = vadd.s32 %v403, %v401
  %v405 = vsel %vm232, %v305, 2147483647
  %v406 = vand.u32 %v405, 65535
  %v407 = vshra.s32 %v405, 16
  %v408 = vcvt.s32.f32 %v406
  %v409 = vcvt.s32.f32 %v407
  %410 = vmin.xlane.f32.xlu0 %v409
  %v411 = vpop.xlane.xlu0 %410
  %vm412 = vcmp.eq.f32.partialorder %v409, %v411
  %v413 = vsel %vm412, %v408, inf
  %414 = vmin.xlane.f32.xlu0 %v413
  %v415 = vpop.xlane.xlu0 %414
  %v416 = vcvt.f32.s32 %v415
  %v417 = vcvt.f32.s32 %v411
  %v418 = vshll.u32 %v417, 16
  %v419 = vadd.s32 %v418, %v416
  %v420 = vsel %vm232, %v306, 2147483647
  %v421 = vand.u32 %v420, 65535
  %v422 = vshra.s32 %v420, 16
  %v423 = vcvt.s32.f32 %v421
  %v424 = vcvt.s32.f32 %v422
  %425 = vmin.xlane.f32.xlu0 %v424
  %v426 = vpop.xlane.xlu0 %425
  %vm427 = vcmp.eq.f32.partialorder %v424, %v426
  %v428 = vsel %vm427, %v423, inf
  %429 = vmin.xlane.f32.xlu0 %v428
  %v430 = vpop.xlane.xlu0 %429
  %v431 = vcvt.f32.s32 %v430
  %v432 = vcvt.f32.s32 %v426
  %v433 = vshll.u32 %v432, 16
  %v434 = vadd.s32 %v433, %v431
  %v435 = vsel %vm232, %v307, 2147483647
  %v436 = vand.u32 %v435, 65535
  %v437 = vshra.s32 %v435, 16
  %v438 = vcvt.s32.f32 %v436
  %v439 = vcvt.s32.f32 %v437
  %440 = vmin.xlane.f32.xlu0 %v439
  %v441 = vpop.xlane.xlu0 %440
  %vm442 = vcmp.eq.f32.partialorder %v439, %v441
  %v443 = vsel %vm442, %v438, inf
  %444 = vmin.xlane.f32.xlu0 %v443
  %v445 = vpop.xlane.xlu0 %444
  %v446 = vcvt.f32.s32 %v445
  %v447 = vcvt.f32.s32 %v441
  %v448 = vshll.u32 %v447, 16
  %v449 = vadd.s32 %v448, %v446
  %v450 = vsel %vm232, %v308, 2147483647
  %v451 = vand.u32 %v450, 65535
  %v452 = vshra.s32 %v450, 16
  %v453 = vcvt.s32.f32 %v451
  %v454 = vcvt.s32.f32 %v452
  %455 = vmin.xlane.f32.xlu0 %v454
  %v456 = vpop.xlane.xlu0 %455
  %vm457 = vcmp.eq.f32.partialorder %v454, %v456
  %v458 = vsel %vm457, %v453, inf
  %459 = vmin.xlane.f32.xlu0 %v458
  %v460 = vpop.xlane.xlu0 %459
  %v461 = vcvt.f32.s32 %v460
  %v462 = vcvt.f32.s32 %v456
  %v463 = vshll.u32 %v462, 16
  %v464 = vadd.s32 %v463, %v461
  %v465 = vsel %vm232, %v309, 2147483647
  %v466 = vand.u32 %v465, 65535
  %v467 = vshra.s32 %v465, 16
  %v468 = vcvt.s32.f32 %v466
  %v469 = vcvt.s32.f32 %v467
  %470 = vmin.xlane.f32.xlu0 %v469
  %v471 = vpop.xlane.xlu0 %470
  %vm472 = vcmp.eq.f32.partialorder %v469, %v471
  %v473 = vsel %vm472, %v468, inf
  %474 = vmin.xlane.f32.xlu0 %v473
  %v475 = vpop.xlane.xlu0 %474
  %v476 = vcvt.f32.s32 %v475
  %v477 = vcvt.f32.s32 %v471
  %v478 = vshll.u32 %v477, 16
  %v479 = vadd.s32 %v478, %v476
  %v480 = vsel %vm232, %v310, 2147483647
  %v481 = vand.u32 %v480, 65535
  %v482 = vshra.s32 %v480, 16
  %v483 = vcvt.s32.f32 %v481
  %v484 = vcvt.s32.f32 %v482
  %485 = vmin.xlane.f32.xlu0 %v484
  %v486 = vpop.xlane.xlu0 %485
  %vm487 = vcmp.eq.f32.partialorder %v484, %v486
  %v488 = vsel %vm487, %v483, inf
  %489 = vmin.xlane.f32.xlu0 %v488
  %v490 = vpop.xlane.xlu0 %489
  %v491 = vcvt.f32.s32 %v490
  %v492 = vcvt.f32.s32 %v486
  %v493 = vshll.u32 %v492, 16
  %v494 = vadd.s32 %v493, %v491
  %v495 = vsel %vm232, %v311, 2147483647
  %v496 = vand.u32 %v495, 65535
  %v497 = vshra.s32 %v495, 16
  %v498 = vcvt.s32.f32 %v496
  %v499 = vcvt.s32.f32 %v497
  %500 = vmin.xlane.f32.xlu0 %v499
  %v501 = vpop.xlane.xlu0 %500
  %vm502 = vcmp.eq.f32.partialorder %v499, %v501
  %v503 = vsel %vm502, %v498, inf
  %504 = vmin.xlane.f32.xlu0 %v503
  %v505 = vpop.xlane.xlu0 %504
  %v506 = vcvt.f32.s32 %v505
  %v507 = vcvt.f32.s32 %v501
  %v508 = vshll.u32 %v507, 16
  %v509 = vadd.s32 %v508, %v506
  %v510 = vsel %vm232, %v312, 2147483647
  %v511 = vand.u32 %v510, 65535
  %v512 = vshra.s32 %v510, 16
  %v513 = vcvt.s32.f32 %v511
  %v514 = vcvt.s32.f32 %v512
  %515 = vmin.xlane.f32.xlu0 %v514
  %v516 = vpop.xlane.xlu0 %515
  %vm517 = vcmp.eq.f32.partialorder %v514, %v516
  %v518 = vsel %vm517, %v513, inf
  %519 = vmin.xlane.f32.xlu0 %v518
  %v520 = vpop.xlane.xlu0 %519
  %v521 = vcvt.f32.s32 %v520
  %v522 = vcvt.f32.s32 %v516
  %v523 = vshll.u32 %v522, 16
  %v524 = vadd.s32 %v523, %v521
  %v525 = vsel %vm232, %v313, 2147483647
  %v526 = vand.u32 %v525, 65535
  %v527 = vshra.s32 %v525, 16
  %v528 = vcvt.s32.f32 %v526
  %v529 = vcvt.s32.f32 %v527
  %530 = vmin.xlane.f32.xlu0 %v529
  %v531 = vpop.xlane.xlu0 %530
  %vm532 = vcmp.eq.f32.partialorder %v529, %v531
  %v533 = vsel %vm532, %v528, inf
  %534 = vmin.xlane.f32.xlu0 %v533
  %v535 = vpop.xlane.xlu0 %534
  %v536 = vcvt.f32.s32 %v535
  %v537 = vcvt.f32.s32 %v531
  %v538 = vshll.u32 %v537, 16
  %v539 = vadd.s32 %v538, %v536
  %v540 = vsel %vm232, %v314, 2147483647
  %v541 = vand.u32 %v540, 65535
  %v542 = vshra.s32 %v540, 16
  %v543 = vcvt.s32.f32 %v541
  %v544 = vcvt.s32.f32 %v542
  %545 = vmin.xlane.f32.xlu0 %v544
  %v546 = vpop.xlane.xlu0 %545
  %vm547 = vcmp.eq.f32.partialorder %v544, %v546
  %v548 = vsel %vm547, %v543, inf
  %549 = vmin.xlane.f32.xlu0 %v548
  %v550 = vpop.xlane.xlu0 %549
  %v551 = vcvt.f32.s32 %v550
  %v552 = vcvt.f32.s32 %v546
  %v553 = vshll.u32 %v552, 16
  %v554 = vadd.s32 %v553, %v551
  %v555 = vlaneseq
  %v556 = vshrl.u32 %v555, 7
  %v557 = vsub.s32 %v282, %v556
  %v558 = vrot.slane %v329, %v557
  %v559 = vadd.s32 %v282, 4294967288
  %v560 = vlaneseq
  %v561 = vshrl.u32 %v560, 7
  %v562 = vsub.s32 %v559, %v561
  %v563 = vrot.slane %v344, %v562
  %vm564 = vcmask 130112
  %v565 = vsel %vm564, %v563, %v558
  %v566 = vadd.s32 %v282, 4294967280
  %v567 = vlaneseq
  %v568 = vshrl.u32 %v567, 7
  %v569 = vsub.s32 %v566, %v568
  %v570 = vrot.slane %v359, %v569
  %vm571 = vcmask 195712
  %v572 = vsel %vm571, %v570, %v565
  %v573 = vadd.s32 %v282, 4294967272
  %v574 = vlaneseq
  %v575 = vshrl.u32 %v574, 7
  %v576 = vsub.s32 %v573, %v575
  %v577 = vrot.slane %v374, %v576
  %vm578 = vcmask 261312
  %v579 = vsel %vm578, %v577, %v572
  %v580 = vadd.s32 %v282, 4294967264
  %v581 = vlaneseq
  %v582 = vshrl.u32 %v581, 7
  %v583 = vsub.s32 %v580, %v582
  %v584 = vrot.slane %v389, %v583
  %vm585 = vcmask 326912
  %v586 = vsel %vm585, %v584, %v579
  %v587 = vadd.s32 %v282, 4294967256
  %v588 = vlaneseq
  %v589 = vshrl.u32 %v588, 7
  %v590 = vsub.s32 %v587, %v589
  %v591 = vrot.slane %v404, %v590
  %vm592 = vcmask 392512
  %v593 = vsel %vm592, %v591, %v586
  %v594 = vadd.s32 %v282, 4294967248
  %v595 = vlaneseq
  %v596 = vshrl.u32 %v595, 7
  %v597 = vsub.s32 %v594, %v596
  %v598 = vrot.slane %v419, %v597
  %vm599 = vcmask 458112
  %v600 = vsel %vm599, %v598, %v593
  %v601 = vadd.s32 %v282, 4294967240
  %v602 = vlaneseq
  %v603 = vshrl.u32 %v602, 7
  %v604 = vsub.s32 %v601, %v603
  %v605 = vrot.slane %v434, %v604
  %vm606 = vcmask 523712
  %v607 = vsel %vm606, %v605, %v600
  %v608 = vadd.s32 %v282, 4294967232
  %v609 = vlaneseq
  %v610 = vshrl.u32 %v609, 7
  %v611 = vsub.s32 %v608, %v610
  %v612 = vrot.slane %v449, %v611
  %vm613 = vcmask 589312
  %v614 = vsel %vm613, %v612, %v607
  %v615 = vadd.s32 %v282, 4294967224
  %v616 = vlaneseq
  %v617 = vshrl.u32 %v616, 7
  %v618 = vsub.s32 %v615, %v617
  %v619 = vrot.slane %v464, %v618
  %vm620 = vcmask 654912
  %v621 = vsel %vm620, %v619, %v614
  %v622 = vadd.s32 %v282, 4294967216
  %v623 = vlaneseq
  %v624 = vshrl.u32 %v623, 7
  %v625 = vsub.s32 %v622, %v624
  %v626 = vrot.slane %v479, %v625
  %vm627 = vcmask 720512
  %v628 = vsel %vm627, %v626, %v621
  %v629 = vadd.s32 %v282, 4294967208
  %v630 = vlaneseq
  %v631 = vshrl.u32 %v630, 7
  %v632 = vsub.s32 %v629, %v631
  %v633 = vrot.slane %v494, %v632
  %vm634 = vcmask 786112
  %v635 = vsel %vm634, %v633, %v628
  %v636 = vadd.s32 %v282, 4294967200
  %v637 = vlaneseq
  %v638 = vshrl.u32 %v637, 7
  %v639 = vsub.s32 %v636, %v638
  %v640 = vrot.slane %v509, %v639
  %vm641 = vcmask 851712
  %v642 = vsel %vm641, %v640, %v635
  %v643 = vadd.s32 %v282, 4294967192
  %v644 = vlaneseq
  %v645 = vshrl.u32 %v644, 7
  %v646 = vsub.s32 %v643, %v645
  %v647 = vrot.slane %v524, %v646
  %vm648 = vcmask 917312
  %v649 = vsel %vm648, %v647, %v642
  %v650 = vadd.s32 %v282, 4294967184
  %v651 = vlaneseq
  %v652 = vshrl.u32 %v651, 7
  %v653 = vsub.s32 %v650, %v652
  %v654 = vrot.slane %v539, %v653
  %vm655 = vcmask 982912
  %v656 = vsel %vm655, %v654, %v649
  %v657 = vadd.s32 %v282, 4294967176
  %v658 = vlaneseq
  %v659 = vshrl.u32 %v658, 7
  %v660 = vsub.s32 %v657, %v659
  %v661 = vrot.slane %v554, %v660
  %vm662 = vcmask 1048512
  %v663 = vsel %vm662, %v661, %v656
  %664 = vst [vmem:[%s3] sm:$0x1] %v663
  // Predicated region
  $region14: #{fertility_predictor.1} parent=0 // pred_check
    _
  $region15: #{fertility_predictor.1} parent=0 // pred_check_branch
    %666 = sbr.rel (0) target = $region17
  $region16: #{fertility_predictor.1} parent=0 // pred_region
    _
  $region17: #{fertility_predictor.1} parent=0 // pred_fallthru
    _
  // Predicated region
  $region18: #{fertility_predictor.1} parent=0 // pred_check
    _
  $region19: #{fertility_predictor.1} parent=0 // pred_check_branch
    %668 = sbr.rel (0) target = $region21
  $region20: #{fertility_predictor.1} parent=0 // pred_region
    _
  $region21: #{fertility_predictor.1} parent=0 // pred_fallthru
    _

</llo_original>
